<compile_context>
chip_gen: v6e
topology: v6e:2x2x1
jax: 0.10.0
libtpu: 0.0.40
codegen_flags: <defaults>
</compile_context>

<pallas_src>
import functools

import jax
import jax.numpy as jnp
from jax.experimental import pallas as pl
from jax.experimental.pallas import tpu as pltpu


def _round_up(x: int, m: int) -> int:
    return (x + m - 1) // m * m


# ---------------------------------------------------------------------------
# Kernels
# ---------------------------------------------------------------------------
def _eval_kernel(x_ref, w_ref, b_ref, o_ref):
    # Native-dtype operands; MXU accumulates in f32.
    out = jnp.dot(x_ref[...], w_ref[...], preferred_element_type=jnp.float32)
    out = out + b_ref[...].astype(jnp.float32)
    o_ref[...] = out.astype(o_ref.dtype)


def _make_train_kernel(dropout_p: float):
    # keep element with probability (1 - p): raw uint32 bits < threshold
    threshold = min(int((1.0 - dropout_p) * (1 << 32)), (1 << 32) - 1)
    scale = 1.0 / (1.0 - dropout_p)

    def kernel(x_ref, bits_ref, w_ref, b_ref, o_ref):
        x = x_ref[...]
        keep = bits_ref[...] < jnp.uint32(threshold)
        x = jnp.where(keep, x * jnp.asarray(scale, x.dtype),
                      jnp.zeros((), x.dtype))
        out = jnp.dot(x, w_ref[...], preferred_element_type=jnp.float32)
        out = out + b_ref[...].astype(jnp.float32)
        o_ref[...] = out.astype(o_ref.dtype)

    return kernel


# ---------------------------------------------------------------------------
# Wrapper
# ---------------------------------------------------------------------------
@functools.partial(jax.jit, static_argnames=("dropout_p", "training"))
def classifier_forward(emb, w_t, b, seed=None, *, dropout_p=0.1, training=False):
    """emb: [B, F], w_t: [F, C] (pre-transposed nn.Linear weight), b: [1, C]."""
    B, F = emb.shape
    Fw, C = w_t.shape
    assert F == Fw and b.shape == (1, C)
    dtype = emb.dtype

    # Lane/sublane alignment: zero-padding does not change the valid outputs.
    F_pad = _round_up(F, 128)
    C_pad = _round_up(C, 128)

    TB_TARGET = 512  # big enough to sit near the HBM roofline, small for VMEM
    B8 = _round_up(B, 8)
    if B8 > TB_TARGET:
        TB = TB_TARGET
        B_pad = _round_up(B, TB)
    else:
        TB = B8
        B_pad = B8

    emb_p = jnp.zeros((B_pad, F_pad), dtype).at[:B, :F].set(emb)
    w_p = jnp.zeros((F_pad, C_pad), w_t.dtype).at[:F, :C].set(w_t)
    b_p = jnp.zeros((1, C_pad), b.dtype).at[:, :C].set(b)

    grid = (B_pad // TB,)
    use_dropout = training and dropout_p > 0.0

    # Rough per-step VMEM footprint; raise the scoped limit for large tiles
    # but never ask past v7x's 64 MiB physical VMEM.
    itm = jnp.dtype(dtype).itemsize
    footprint = (2 * TB * F_pad * itm                      # emb (double-buffered)
                 + F_pad * C_pad * jnp.dtype(w_t.dtype).itemsize
                 + C_pad * jnp.dtype(b.dtype).itemsize
                 + 2 * TB * C_pad * itm)                   # out (double-buffered)
    if use_dropout:
        footprint += 2 * TB * F_pad * 4                    # uint32 dropout bits
    vmem_limit = int(min(64 * 1024 * 1024,
                         max(32 * 1024 * 1024, 2 * footprint)))

    compiler_params = pltpu.CompilerParams(
        dimension_semantics=("parallel",),
        vmem_limit_bytes=vmem_limit)

    if use_dropout:
        kernel = _make_train_kernel(float(dropout_p))
        # Host-side PRNG bits (works on TPU and in interpret mode); the mask
        # apply + matmul remain fused inside the kernel.
        seed_scalar = jnp.asarray(seed, jnp.int32).reshape(-1)[0]
        key = jax.random.PRNGKey(seed_scalar)
        bits_p = jax.random.bits(key, (B_pad, F_pad), jnp.uint32)
        in_specs = [
            pl.BlockSpec((TB, F_pad), lambda i: (i, 0)),      # emb tile
            pl.BlockSpec((TB, F_pad), lambda i: (i, 0)),      # dropout bits tile
            pl.BlockSpec((F_pad, C_pad), lambda i: (0, 0)),   # weight (resident)
            pl.BlockSpec((1, C_pad), lambda i: (0, 0)),       # bias (resident)
        ]
        args = (emb_p, bits_p, w_p, b_p)
    else:
        kernel = _eval_kernel
        in_specs = [
            pl.BlockSpec((TB, F_pad), lambda i: (i, 0)),
            pl.BlockSpec((F_pad, C_pad), lambda i: (0, 0)),
            pl.BlockSpec((1, C_pad), lambda i: (0, 0)),
        ]
        args = (emb_p, w_p, b_p)

    grid_spec = pltpu.PrefetchScalarGridSpec(
        num_scalar_prefetch=0,
        grid=grid,
        in_specs=in_specs,
        out_specs=pl.BlockSpec((TB, C_pad), lambda i: (i, 0)),
    )

    out_p = pl.pallas_call(
        kernel,
        out_shape=jax.ShapeDtypeStruct((B_pad, C_pad), dtype),
        grid_spec=grid_spec,
        compiler_params=compiler_params,
    )(*args)

    return out_p[:B, :C]


def init_classifier_params(key, feature_dim, class_num, dtype=jnp.float32):
    """Deterministic nn.Linear-style init (uniform(-1/sqrt(F), 1/sqrt(F)))."""
    kw, kb = jax.random.split(key)
    bound = 1.0 / (feature_dim ** 0.5)
    # torch stores weight as [C, F]; we keep it pre-transposed as [F, C].
    w_t = jax.random.uniform(kw, (feature_dim, class_num), dtype,
                             minval=-bound, maxval=bound)
    b = jax.random.uniform(kb, (1, class_num), dtype,
                           minval=-bound, maxval=bound)
    return w_t, b


if __name__ == "__main__":
    key = jax.random.PRNGKey(0)
    k_emb, k_param = jax.random.split(key)

    B, FEATURE_DIM, CLASS_NUM = 8, 32, 16
    emb = jax.random.normal(k_emb, (B, FEATURE_DIM), jnp.float32)
    w_t, b = init_classifier_params(k_param, FEATURE_DIM, CLASS_NUM)

    # ---- eval-mode forward (dropout == identity), f32 operands ----
    out = classifier_forward(emb, w_t, b, dropout_p=0.1, training=False)
    out = jax.block_until_ready(out)
    ref = emb @ w_t + b
    assert out.shape == (B, CLASS_NUM)
    assert jnp.allclose(out, ref, atol=1e-5, rtol=1e-5)

    # ---- eval-mode forward with bf16 operands (native MXU fast path) ----
    out_bf16 = classifier_forward(emb.astype(jnp.bfloat16),
                                  w_t.astype(jnp.bfloat16),
                                  b.astype(jnp.bfloat16),
                                  dropout_p=0.1, training=False)
    out_bf16 = jax.block_until_ready(out_bf16)
    assert out_bf16.shape == (B, CLASS_NUM)
    assert jnp.allclose(out_bf16.astype(jnp.float32), ref, atol=0.1, rtol=0.1)

    # ---- training-mode forward (fused inverted dropout + matmul) ----
    seed = jnp.array([0], dtype=jnp.int32)
    out_tr = classifier_forward(emb, w_t, b, seed, dropout_p=0.1, training=True)
    out_tr = jax.block_until_ready(out_tr)
    assert out_tr.shape == (B, CLASS_NUM)
    assert bool(jnp.all(jnp.isfinite(out_tr)))

    print("KERNEL_OK")
</pallas_src>

<mosaic_0001>
module attributes {stable_mosaic.version = 11 : i64} {
  func.func @_eval_kernel(%arg0: i32, %arg1: memref<8x128xf32, #tpu.memory_space<vmem>>, %arg2: memref<128x128xf32, #tpu.memory_space<vmem>>, %arg3: memref<1x128xf32, #tpu.memory_space<vmem>>, %arg4: memref<8x128xf32, #tpu.memory_space<vmem>>) attributes {dimension_semantics = [#tpu.dimension_semantics<parallel>], iteration_bounds = array<i64: 1>, scalar_prefetch = 0 : i64, scratch_operands = 0 : i64, tpu.core_type = #tpu.core_type<tc>, window_params = [{transform_indices = @transform_0, window_bounds = array<i64: 8, 128>}, {pipeline_mode = #tpu.pipeline_mode<synchronous>, transform_indices = @transform_1, window_bounds = array<i64: 128, 128>}, {pipeline_mode = #tpu.pipeline_mode<synchronous>, transform_indices = @transform_2, window_bounds = array<i64: 1, 128>}, {transform_indices = @transform_3, window_bounds = array<i64: 8, 128>}]} {
    %c0 = arith.constant 0 : index
    %c0_0 = arith.constant 0 : index
    %0 = vector.load %arg1[%c0, %c0_0] : memref<8x128xf32, #tpu.memory_space<vmem>>, vector<8x128xf32>
    %c0_1 = arith.constant 0 : index
    %c0_2 = arith.constant 0 : index
    %1 = vector.load %arg2[%c0_1, %c0_2] : memref<128x128xf32, #tpu.memory_space<vmem>>, vector<128x128xf32>
    %cst = arith.constant dense<0.000000e+00> : vector<8x128xf32>
    %2 = tpu.matmul %0, %1, %cst {dimension_numbers = #tpu.dot_dimension_numbers<[1], [0], [0], [1], [0, 0, 1, 1], [], []>} : vector<8x128xf32>, vector<128x128xf32>, vector<8x128xf32> -> vector<8x128xf32>
    %c0_3 = arith.constant 0 : index
    %c0_4 = arith.constant 0 : index
    %3 = vector.load %arg3[%c0_3, %c0_4] : memref<1x128xf32, #tpu.memory_space<vmem>>, vector<1x128xf32>
    %4 = vector.broadcast %3 : vector<1x128xf32> to vector<8x128xf32>
    %5 = arith.addf %2, %4 : vector<8x128xf32>
    %c0_5 = arith.constant 0 : index
    %c0_6 = arith.constant 0 : index
    %6 = vector.load %arg4[%c0_5, %c0_6] : memref<8x128xf32, #tpu.memory_space<vmem>>, vector<8x128xf32>
    tpu.vector_store %arg4[%c0_5, %c0_6], %5 {strides = array<i32>} : memref<8x128xf32, #tpu.memory_space<vmem>>, vector<8x128xf32>,
    return
  }
  func.func @transform_0(%arg0: i32) -> (i32, i32) {
    %c0_i32 = arith.constant 0 : i32
    %c0_i32_0 = arith.constant 0 : i32
    return %arg0, %c0_i32 : i32, i32
  }
  func.func @transform_1(%arg0: i32) -> (i32, i32) {
    %c0_i32 = arith.constant 0 : i32
    %c0_i32_0 = arith.constant 0 : i32
    %c0_i32_1 = arith.constant 0 : i32
    return %c0_i32, %c0_i32_0 : i32, i32
  }
  func.func @transform_2(%arg0: i32) -> (i32, i32) {
    %c0_i32 = arith.constant 0 : i32
    %c0_i32_0 = arith.constant 0 : i32
    %c0_i32_1 = arith.constant 0 : i32
    return %c0_i32, %c0_i32_0 : i32, i32
  }
  func.func @transform_3(%arg0: i32) -> (i32, i32) {
    %c0_i32 = arith.constant 0 : i32
    %c0_i32_0 = arith.constant 0 : i32
    return %arg0, %c0_i32 : i32, i32
  }
}

</mosaic_0001>

<llo_original>
// kernel: classifier_forward.1
$region0: #{classifier_forward.1}
  #allocation0 [shape = 'u32[]', space=smem, size = 0x4, offset = 0x4, fixed_abs, tag = 'smem constant byte address 0x4 - core index']
  #allocation1 [shape = 'u32[144,128]{1,0:T(1,128)}', space=vmem, size = 0x12000, scoped, tag = 'internal scratch']
  %s0 = inlined_call_operand.vmem [shape: f32[8,128], index: 0, kind: input, shape index: {}]
  %s1 = inlined_call_operand.vmem [shape: f32[128,128], index: 1, kind: input, shape index: {}]
  %s2 = inlined_call_operand.vmem [shape: f32[1,128], index: 2, kind: input, shape index: {}]
  %s3 = inlined_call_operand.hbm [shape: f32[8,128], index: 3, kind: output, shape index: {}]
  %s4 = sld [smem:[#allocation0]]
  $region22: #{classifier_forward.1} parent=0
    _
  %s6 = ssub.s32 1, %s4
  %s7 = scalar_select 0, %s6, %s4
  $region1: #{classifier_forward.1} parent=0
    #allocation2 [shape = 'u8[4096]{0}', space=vmem, size = 0x1000, scoped, tag = 'output window, operand 0, single buffered']
    #allocation3 [shape = 's32[1]{0}', space=sflag, size = 0x4, scoped, tag = 'scoped memory for classifier_forward.1']
    %8 = vsyncpa [#allocation3], 0
    // Predicated region
    $region2: #{classifier_forward.1} parent=1 // pred_check
      _
    $region3: #{classifier_forward.1} parent=1 // pred_check_branch
      %10 = sbr.rel (0) target = $region5
    $region4: #{classifier_forward.1} parent=1 // pred_region
      _
    $region5: #{classifier_forward.1} parent=1 // pred_fallthru
      _
    // Predicated region
    $region6: #{classifier_forward.1} parent=1 // pred_check
      _
    $region7: #{classifier_forward.1} parent=1 // pred_check_branch
      %12 = sbr.rel (0) target = $region9
    $region8: #{classifier_forward.1} parent=1 // pred_region
      _
    $region9: #{classifier_forward.1} parent=1 // pred_fallthru
      _
    // Predicated region
    $region10: #{classifier_forward.1} parent=1 // pred_check
      _
    $region11: #{classifier_forward.1} parent=1 // pred_check_branch
      %14 = sbr.rel (0) target = $region13
    $region12: #{classifier_forward.1} parent=1 // pred_region
      _
    $region13: #{classifier_forward.1} parent=1 // pred_fallthru
      _
    %v15 = vld [vmem:[%s0] sm:$0xff]
    %v16 = vld [vmem:[%s1] sm:$0xff]
    %v17 = vld [vmem:[%s1 + $0x8] sm:$0xff]
    %v18 = vld [vmem:[%s1 + $0x10] sm:$0xff]
    %v19 = vld [vmem:[%s1 + $0x18] sm:$0xff]
    %v20 = vld [vmem:[%s1 + $0x20] sm:$0xff]
    %v21 = vld [vmem:[%s1 + $0x28] sm:$0xff]
    %v22 = vld [vmem:[%s1 + $0x30] sm:$0xff]
    %v23 = vld [vmem:[%s1 + $0x38] sm:$0xff]
    %v24 = vld [vmem:[%s1 + $0x40] sm:$0xff]
    %v25 = vld [vmem:[%s1 + $0x48] sm:$0xff]
    %v26 = vld [vmem:[%s1 + $0x50] sm:$0xff]
    %v27 = vld [vmem:[%s1 + $0x58] sm:$0xff]
    %v28 = vld [vmem:[%s1 + $0x60] sm:$0xff]
    %v29 = vld [vmem:[%s1 + $0x68] sm:$0xff]
    %v30 = vld [vmem:[%s1 + $0x70] sm:$0xff]
    %v31 = vld [vmem:[%s1 + $0x78] sm:$0xff]
    %v32 = vld [vmem:[%s2] sm:$0x1]
    %v34 = vlaneseq
    %v35 = vshrl.u32 %v34, 7
    %v36 = vsub.s32 0, %v35
    %v37 = vrot.slane %v32, %v36
    %39 = vmatprep.subr.mxu0 0.0
    %40 = vmatpush1.msra.mxu0 %v31
    %41 = vmatprep.subr.mxu0 0.0
    %42 = vmatpush1.msra.mxu0 %v30
    %43 = vmatprep.subr.mxu0 0.0
    %44 = vmatpush1.msra.mxu0 %v29
    %45 = vmatprep.subr.mxu0 0.0
    %46 = vmatpush1.msra.mxu0 %v28
    %47 = vmatprep.subr.mxu0 0.0
    %48 = vmatpush1.msra.mxu0 %v27
    %49 = vmatprep.subr.mxu0 0.0
    %50 = vmatpush1.msra.mxu0 %v26
    %51 = vmatprep.subr.mxu0 0.0
    %52 = vmatpush1.msra.mxu0 %v25
    %53 = vmatprep.subr.mxu0 0.0
    %54 = vmatpush1.msra.mxu0 %v24
    %55 = vmatprep.subr.mxu0 0.0
    %56 = vmatpush1.msra.mxu0 %v23
    %57 = vmatprep.subr.mxu0 0.0
    %58 = vmatpush1.msra.mxu0 %v22
    %59 = vmatprep.subr.mxu0 0.0
    %60 = vmatpush1.msra.mxu0 %v21
    %61 = vmatprep.subr.mxu0 0.0
    %62 = vmatpush1.msra.mxu0 %v20
    %63 = vmatprep.subr.mxu0 0.0
    %64 = vmatpush1.msra.mxu0 %v19
    %65 = vmatprep.subr.mxu0 0.0
    %66 = vmatpush1.msra.mxu0 %v18
    %67 = vmatprep.subr.mxu0 0.0
    %68 = vmatpush1.msra.mxu0 %v17
    %69 = vmatprep.subr.mxu0 0.0
    %70 = vmatpush1.msra.mxu0 %v16
    %71 = vmatprep.subr.mxu0 0.0
    %72 = vmatpush2.msra.mxu0 0.0
    %73 = vmatprep.subr.mxu0 0.0
    %74 = vmatpush2.msra.mxu0 0.0
    %75 = vmatprep.subr.mxu0 0.0
    %76 = vmatpush2.msra.mxu0 0.0
    %77 = vmatprep.subr.mxu0 0.0
    %78 = vmatpush2.msra.mxu0 0.0
    %79 = vmatprep.subr.mxu0 0.0
    %80 = vmatpush2.msra.mxu0 0.0
    %81 = vmatprep.subr.mxu0 0.0
    %82 = vmatpush2.msra.mxu0 0.0
    %83 = vmatprep.subr.mxu0 0.0
    %84 = vmatpush2.msra.mxu0 0.0
    %85 = vmatprep.subr.mxu0 0.0
    %86 = vmatpush2.msra.mxu0 0.0
    %87 = vmatprep.subr.mxu0 0.0
    %88 = vmatpush2.msra.mxu0 0.0
    %89 = vmatprep.subr.mxu0 0.0
    %90 = vmatpush2.msra.mxu0 0.0
    %91 = vmatprep.subr.mxu0 0.0
    %92 = vmatpush2.msra.mxu0 0.0
    %93 = vmatprep.subr.mxu0 0.0
    %94 = vmatpush2.msra.mxu0 0.0
    %95 = vmatprep.subr.mxu0 0.0
    %96 = vmatpush2.msra.mxu0 0.0
    %97 = vmatprep.subr.mxu0 0.0
    %98 = vmatpush2.msra.mxu0 0.0
    %99 = vmatprep.subr.mxu0 0.0
    %100 = vmatpush2.msra.mxu0 0.0
    %101 = vmatprep.subr.mxu0 0.0
    %102 = vmatpush2.msra.mxu0 0.0
    %103 = vmatprep.mubr.f32.mxu0 0.0
    %104 = vmatmul.mubr.f32.gmra.mxu0 %v15
    %v105 = vpop.f32.mrf.mxu0
    %v106 = vadd.f32 %v37, %v105
    %v107 = vpop.f32.mrf.mxu0
    %108 = vdwg.mxu0
    %109 = vst [vmem:[#allocation2] sm:$0xff] %v106
    // Predicated region
    $region14: #{classifier_forward.1} parent=1 // pred_check
      _
    $region15: #{classifier_forward.1} parent=1 // pred_check_branch
      %111 = sbr.rel (0) target = $region17
    $region16: #{classifier_forward.1} parent=1 // pred_region
      %s113 = ssub.s32 128, 128
      %114 = vsyncadd [#allocation3], %s113
      %s116 = sshll.u32 [#allocation2], 4
      %s117 = int_to_ptr.vmem [resolvable:$true] %s116
      %119 = dma.vmem_to_hbm [thread:$0]  %s117, 128, %s3, [#allocation3]
    $region17: #{classifier_forward.1} parent=1 // pred_fallthru
      _
    // Predicated region
    $region18: #{classifier_forward.1} parent=1 // pred_check
      _
    $region19: #{classifier_forward.1} parent=1 // pred_check_branch
      %121 = sbr.rel (0) target = $region21
    $region20: #{classifier_forward.1} parent=1 // pred_region
      %122 = dma.done [#allocation3], 128
    $region21: #{classifier_forward.1} parent=1 // pred_fallthru
      _
    %123 = vsyncpa [#allocation3], 1

</llo_original>
